<compile_context>
chip_gen: v5e
topology: v5e:2x2
jax: 0.10.0
libtpu: 0.0.40
codegen_flags: <defaults>
</compile_context>

<pallas_src>
import functools

import jax
import jax.numpy as jnp
from jax import lax
from jax.experimental import pallas as pl
from jax.experimental.pallas import tpu as pltpu


# ----------------------------- dropout hashing ------------------------------

def _i32(x):
    """Python int -> int32 constant with two's-complement wrap."""
    x &= 0xFFFFFFFF
    if x >= 1 << 31:
        x -= 1 << 32
    return jnp.int32(x)


def _lsr32(x, n):
    """Logical right shift of an int32 array by a static amount n."""
    return (x >> n) & ((1 << (32 - n)) - 1)


def _mix32(x):
    """xorshift-multiply integer finalizer (lowbias32-style), int32 wrap."""
    x = x ^ _lsr32(x, 16)
    x = x * _i32(0x7FEB352D)
    x = x ^ _lsr32(x, 15)
    x = x * _i32(0x846CA68B)
    x = x ^ _lsr32(x, 16)
    return x


def _keep_mask(seed, b0, q0, k0, shape, dropout_p):
    """Decomposition-invariant dropout keep mask, P(keep) = 1 - p.

    Hash of the *global* (batch, query, key) element indices, so the realized
    mask does not depend on block_b / block_q / block_k or which core runs a
    given grid step.
    """
    # TODO(synk): on hardware pltpu.prng_random_bits is cheaper, but it has no
    # interpret-mode lowering; the jnp integer hash keeps the kernel portable.
    gb = b0 + lax.broadcasted_iota(jnp.int32, shape, 0)
    gq = q0 + lax.broadcasted_iota(jnp.int32, shape, 1)
    gk = k0 + lax.broadcasted_iota(jnp.int32, shape, 2)
    h = seed ^ (gb * _i32(0x9E3779B1))
    h = _mix32(h ^ (gq * _i32(0x85EBCA77)))
    h = _mix32(h ^ (gk * _i32(0xC2B2AE3D)))
    thresh = min(int(round(dropout_p * (1 << 31))), (1 << 31) - 1)
    return (h & _i32(0x7FFFFFFF)) >= _i32(thresh)


# --------------------------------- kernel -----------------------------------

def _flash_sdpa_kernel(seed_ref, q_ref, k_ref, v_ref, o_ref,
                       m_sc, l_sc, acc_sc, *,
                       scale, dropout_p, block_b, block_q, block_k,
                       use_bf16, exact_softmax):
    kk = pl.program_id(2)

    @pl.when(kk == 0)
    def _():
        m_sc[...] = jnp.full_like(m_sc, -jnp.inf)
        l_sc[...] = jnp.zeros_like(l_sc)
        acc_sc[...] = jnp.zeros_like(acc_sc)

    q = q_ref[...]                               # (bb, bq, D)
    if scale != 1.0:
        # Fold 1/inv_scale_factor into Q (bq*D muls instead of bq*Sk), in the
        # native precision *before* any bf16 cast.
        q = q * jnp.asarray(scale, q.dtype)
    k = k_ref[...]                               # (bb, bk, D)
    v = v_ref[...]                               # (bb, bk, Dv_pad)
    if use_bf16:
        q = q.astype(jnp.bfloat16)
        k = k.astype(jnp.bfloat16)
        v = v.astype(jnp.bfloat16)

    # Scores for this (q-tile, k-tile): MXU, f32 accumulation.
    s = jnp.einsum('bqd,bkd->bqk', q, k, preferred_element_type=jnp.float32)

    # Online (flash-style) softmax update.
    m_prev = m_sc[...]
    m_new = jnp.maximum(m_prev, jnp.max(s, axis=-1, keepdims=True))
    alpha = jnp.exp(m_prev - m_new)
    e = jnp.exp(s - m_new)
    l_sc[...] = alpha * l_sc[...] + jnp.sum(e, axis=-1, keepdims=True)
    m_sc[...] = m_new

    # Dropout on the un-normalized probabilities: the row normalizer is a
    # positive scalar applied afterwards, so masking e is equivalent to
    # masking softmax(s).
    if dropout_p > 0.0:
        keep = _keep_mask(seed_ref[0],
                          pl.program_id(0) * block_b,
                          pl.program_id(1) * block_q,
                          kk * block_k,
                          s.shape, dropout_p)
        e = jnp.where(keep, e, 0.0)

    acc_sc[...] = alpha * acc_sc[...] + jnp.einsum(
        'bqk,bkd->bqd', e.astype(v.dtype), v,
        preferred_element_type=jnp.float32)

    @pl.when(kk == pl.num_programs(2) - 1)
    def _():
        denom = l_sc[...]
        if exact_softmax:
            inv = 1.0 / denom
        else:
            inv = pl.reciprocal(denom, approx=True)     # EUP slot, ~free
        if dropout_p > 0.0:
            inv = inv * (1.0 / (1.0 - dropout_p))        # inverted-dropout scale
        o_ref[...] = (acc_sc[...] * inv).astype(o_ref.dtype)


# -------------------------------- wrapper ------------------------------------

def _pick_tile(n, preferred):
    """Largest t <= preferred with n % t == 0 and (t % 8 == 0 or t == n)."""
    if n <= preferred:
        return n
    for t in range(preferred, 7, -1):
        if n % t == 0 and t % 8 == 0:
            return t
    return n


def sdpa_dropout(query, key, value, *, dropout_p, inv_scale_factor, seed=0,
                 block_b=1, block_q=None, block_k=None,
                 prefer_bf16_matmul=True, pad_out_lanes=True,
                 exact_softmax=False):
    B, Sq, D = query.shape
    Bk, Sk, Dk = key.shape
    Bv, Skv, Dv = value.shape
    assert B == Bk == Bv and D == Dk and Sk == Skv, "shape mismatch"

    dropout_p = float(dropout_p)
    out_dtype = query.dtype

    if dropout_p >= 1.0:
        # PyTorch F.dropout with p >= 1 zeroes everything -> result is exactly
        # zero.  Plain XLA memset beats any pallas_call here.
        return jnp.zeros((B, Sq, Dv), dtype=out_dtype)

    # Lane-dense output: pad Dv up to a multiple of 128 so stores are unmasked.
    if pad_out_lanes and Dv % 128 != 0:
        dv_pad = (-(-Dv // 128)) * 128
        value_p = jnp.pad(value, ((0, 0), (0, 0), (0, dv_pad - Dv)))
    else:
        dv_pad = Dv
        value_p = value

    # ---- tile selection (generation-aware VMEM budget) ----
    block_b = max(1, min(block_b, B))
    assert B % block_b == 0, "block_b must divide the batch"
    if block_q is None:
        block_q = _pick_tile(Sq, 256)
    if block_k is None:
        block_k = _pick_tile(Sk, 512)
    assert Sq % block_q == 0 and (block_q % 8 == 0 or block_q == Sq)
    assert Sk % block_k == 0 and (block_k % 8 == 0 or block_k == Sk)

    itemsize = query.dtype.itemsize

    def vmem_bytes(bq, bk):
        blocks = (block_b * bq * D + block_b * bk * D
                  + block_b * bk * dv_pad + block_b * bq * dv_pad) * itemsize
        scratch = block_b * bq * (dv_pad + 2) * 4
        scores = block_b * bq * bk * 4 * 4           # s/e/mask temporaries
        return 2 * blocks + scratch + scores          # 2x: double-buffered DMA

    budget = 20 * 1024 * 1024                         # fits v7x's 64 MiB w/ room
    while vmem_bytes(block_q, block_k) > budget:
        if block_k % 16 == 0 and block_k > 128:
            block_k //= 2
        elif block_q % 16 == 0 and block_q > 128:
            block_q //= 2
        else:
            break

    grid = (B // block_b, Sq // block_q, Sk // block_k)

    use_bf16 = bool(prefer_bf16_matmul) and query.dtype == jnp.float32

    kernel = functools.partial(
        _flash_sdpa_kernel,
        scale=1.0 / float(inv_scale_factor),
        dropout_p=dropout_p,
        block_b=block_b, block_q=block_q, block_k=block_k,
        use_bf16=use_bf16, exact_softmax=bool(exact_softmax))

    seed_arr = jnp.asarray([seed], dtype=jnp.int32)

    cost = pl.CostEstimate(
        flops=2 * B * Sq * Sk * (D + dv_pad),
        transcendentals=B * Sq * Sk,
        bytes_accessed=(query.size + key.size + value_p.size
                        + B * Sq * dv_pad) * itemsize)

    out = pl.pallas_call(
        kernel,
        out_shape=jax.ShapeDtypeStruct((B, Sq, dv_pad), out_dtype),
        grid_spec=pltpu.PrefetchScalarGridSpec(
            num_scalar_prefetch=1,                    # seed lives in SMEM
            grid=grid,
            in_specs=[
                # Q stays resident across the k (reduction) axis.
                pl.BlockSpec((block_b, block_q, D),
                             lambda b, q, k, s: (b, q, 0)),
                pl.BlockSpec((block_b, block_k, D),
                             lambda b, q, k, s: (b, k, 0)),
                pl.BlockSpec((block_b, block_k, dv_pad),
                             lambda b, q, k, s: (b, k, 0)),
            ],
            out_specs=pl.BlockSpec((block_b, block_q, dv_pad),
                                   lambda b, q, k, s: (b, q, 0)),
            scratch_shapes=[
                pltpu.VMEM((block_b, block_q, 1), jnp.float32),       # run max
                pltpu.VMEM((block_b, block_q, 1), jnp.float32),       # run sum
                pltpu.VMEM((block_b, block_q, dv_pad), jnp.float32),  # acc
            ]),
        compiler_params=pltpu.CompilerParams(
            dimension_semantics=("parallel", "parallel", "arbitrary"),
            vmem_limit_bytes=int(min(48 * 1024 * 1024,
                                     max(32 * 1024 * 1024,
                                         2 * vmem_bytes(block_q, block_k))))),
        cost_estimate=cost,
    )(seed_arr, query, key, value_p)

    if dv_pad != Dv:
        out = out[:, :, :Dv]
    return out


# ------------------------------- reference -----------------------------------

def _reference(query, key, value, dropout_p, inv_scale_factor):
    qk = jnp.einsum('bqd,bkd->bqk', query, key) / inv_scale_factor
    p = jax.nn.softmax(qk, axis=-1)
    if dropout_p >= 1.0:
        p = jnp.zeros_like(p)                 # PyTorch p==1 behavior
    return jnp.einsum('bqk,bkd->bqd', p, value)


if __name__ == "__main__":
    dropout_p = 1          # as in the PyTorch script
    inv_scale_factor = 1   # as in the PyTorch script

    # Small, self-consistent shapes: batch=2, seq 16/32, hidden 32.
    B, Sq, Sk, D, Dv = 2, 16, 32, 32, 32
    k0, k1, k2 = jax.random.split(jax.random.PRNGKey(0), 3)
    query = jax.random.normal(k0, (B, Sq, D), dtype=jnp.float32)
    key = jax.random.normal(k1, (B, Sk, D), dtype=jnp.float32)
    value = jax.random.normal(k2, (B, Sk, Dv), dtype=jnp.float32)

    # 1) Module's configured case (p == 1): exact zero output.
    out = jax.block_until_ready(
        sdpa_dropout(query, key, value,
                     dropout_p=dropout_p, inv_scale_factor=inv_scale_factor))
    ref = _reference(query, key, value, dropout_p, inv_scale_factor)
    assert out.shape == (B, Sq, Dv)
    assert jnp.allclose(out, ref, atol=1e-6, rtol=1e-6), "p=1 mismatch"

    # 2) No dropout, non-trivial scale, multi-step (b, q, k) grid, bf16 MXU.
    out0 = jax.block_until_ready(
        sdpa_dropout(query, key, value, dropout_p=0.0, inv_scale_factor=2.0,
                     block_q=8, block_k=8))
    ref0 = _reference(query, key, value, 0.0, 2.0)
    assert jnp.allclose(out0, ref0, atol=2e-2, rtol=2e-2), "p=0 bf16 mismatch"

    # 2b) Exact-precision path (f32 matmul, exact softmax division).
    out1 = jax.block_until_ready(
        sdpa_dropout(query, key, value, dropout_p=0.0, inv_scale_factor=2.0,
                     block_q=8, block_k=8, prefer_bf16_matmul=False,
                     exact_softmax=True))
    assert jnp.allclose(out1, ref0, atol=1e-4, rtol=1e-4), "p=0 f32 mismatch"

    # 3) Dropout 0 < p < 1: finite, correct shape, and the hash-based mask is
    #    invariant to the tiling (same seed, different block sizes).
    outd = jax.block_until_ready(
        sdpa_dropout(query, key, value, dropout_p=0.5, inv_scale_factor=1.0,
                     seed=123))
    outd2 = jax.block_until_ready(
        sdpa_dropout(query, key, value, dropout_p=0.5, inv_scale_factor=1.0,
                     seed=123, block_q=8, block_k=8))
    assert outd.shape == (B, Sq, Dv)
    assert bool(jnp.all(jnp.isfinite(outd))), "dropout produced non-finite"
    assert jnp.allclose(outd, outd2, atol=5e-2, rtol=5e-2), \
        "dropout mask not tiling-invariant"

    print("KERNEL_OK")
</pallas_src>

<mosaic_0001>
module attributes {stable_mosaic.version = 11 : i64} {
  func.func @_flash_sdpa_kernel(%arg0: i32, %arg1: i32, %arg2: i32, %arg3: memref<1xi32, #tpu.memory_space<smem>>, %arg4: memref<1x8x32xf32, #tpu.memory_space<vmem>>, %arg5: memref<1x8x32xf32, #tpu.memory_space<vmem>>, %arg6: memref<1x8x128xf32, #tpu.memory_space<vmem>>, %arg7: memref<1x8x128xf32, #tpu.memory_space<vmem>>, %arg8: memref<1x8x1xf32, #tpu.memory_space<vmem>>, %arg9: memref<1x8x1xf32, #tpu.memory_space<vmem>>, %arg10: memref<1x8x128xf32, #tpu.memory_space<vmem>>) attributes {dimension_semantics = [#tpu.dimension_semantics<parallel>, #tpu.dimension_semantics<parallel>, #tpu.dimension_semantics<arbitrary>], iteration_bounds = array<i64: 2, 2, 4>, scalar_prefetch = 1 : i64, scratch_operands = 3 : i64, tpu.core_type = #tpu.core_type<tc>, window_params = [{transform_indices = @transform_0, window_bounds = array<i64: 1, 8, 32>}, {transform_indices = @transform_1, window_bounds = array<i64: 1, 8, 32>}, {transform_indices = @transform_2, window_bounds = array<i64: 1, 8, 128>}, {transform_indices = @transform_3, window_bounds = array<i64: 1, 8, 128>}]} {
    %c0_i32 = arith.constant 0 : i32
    %0 = arith.cmpi eq, %arg2, %c0_i32 : i32
    %1 = arith.extui %0 : i1 to i32
    %c0_i32_0 = arith.constant 0 : i32
    %2 = arith.cmpi ne, %1, %c0_i32_0 : i32
    scf.if %2 {
      %cst_32 = arith.constant 0xFF800000 : f32
      %38 = vector.broadcast %cst_32 : f32 to vector<1x8x1xf32>
      %c0_33 = arith.constant 0 : index
      %c0_34 = arith.constant 0 : index
      %c0_35 = arith.constant 0 : index
      %39 = vector.load %arg8[%c0_33, %c0_34, %c0_35] : memref<1x8x1xf32, #tpu.memory_space<vmem>>, vector<1x8x1xf32>
      tpu.vector_store %arg8[%c0_33, %c0_34, %c0_35], %38 {strides = array<i32>} : memref<1x8x1xf32, #tpu.memory_space<vmem>>, vector<1x8x1xf32>,
      %cst_36 = arith.constant 0.000000e+00 : f32
      %40 = vector.broadcast %cst_36 : f32 to vector<1x8x1xf32>
      %c0_37 = arith.constant 0 : index
      %c0_38 = arith.constant 0 : index
      %c0_39 = arith.constant 0 : index
      %41 = vector.load %arg9[%c0_37, %c0_38, %c0_39] : memref<1x8x1xf32, #tpu.memory_space<vmem>>, vector<1x8x1xf32>
      tpu.vector_store %arg9[%c0_37, %c0_38, %c0_39], %40 {strides = array<i32>} : memref<1x8x1xf32, #tpu.memory_space<vmem>>, vector<1x8x1xf32>,
      %cst_40 = arith.constant 0.000000e+00 : f32
      %42 = vector.broadcast %cst_40 : f32 to vector<1x8x128xf32>
      %c0_41 = arith.constant 0 : index
      %c0_42 = arith.constant 0 : index
      %c0_43 = arith.constant 0 : index
      %43 = vector.load %arg10[%c0_41, %c0_42, %c0_43] : memref<1x8x128xf32, #tpu.memory_space<vmem>>, vector<1x8x128xf32>
      tpu.vector_store %arg10[%c0_41, %c0_42, %c0_43], %42 {strides = array<i32>} : memref<1x8x128xf32, #tpu.memory_space<vmem>>, vector<1x8x128xf32>,
    } else {
    }
    %c0 = arith.constant 0 : index
    %c0_1 = arith.constant 0 : index
    %c0_2 = arith.constant 0 : index
    %3 = vector.load %arg4[%c0, %c0_1, %c0_2] : memref<1x8x32xf32, #tpu.memory_space<vmem>>, vector<1x8x32xf32>
    %cst = arith.constant 5.000000e-01 : f32
    %4 = vector.broadcast %cst : f32 to vector<1x8x32xf32>
    %5 = arith.mulf %3, %4 : vector<1x8x32xf32>
    %c0_3 = arith.constant 0 : index
    %c0_4 = arith.constant 0 : index
    %c0_5 = arith.constant 0 : index
    %6 = vector.load %arg5[%c0_3, %c0_4, %c0_5] : memref<1x8x32xf32, #tpu.memory_space<vmem>>, vector<1x8x32xf32>
    %c0_6 = arith.constant 0 : index
    %c0_7 = arith.constant 0 : index
    %c0_8 = arith.constant 0 : index
    %7 = vector.load %arg6[%c0_6, %c0_7, %c0_8] : memref<1x8x128xf32, #tpu.memory_space<vmem>>, vector<1x8x128xf32>
    %8 = arith.truncf %5 : vector<1x8x32xf32> to vector<1x8x32xbf16>
    %9 = arith.truncf %6 : vector<1x8x32xf32> to vector<1x8x32xbf16>
    %10 = arith.truncf %7 : vector<1x8x128xf32> to vector<1x8x128xbf16>
    "tpu.trace_start"() <{level = 10 : i32, message = "bqd,bkd->bqk"}> : () -> ()
    %cst_9 = arith.constant dense<0.000000e+00> : vector<1x8x8xf32>
    %11 = tpu.matmul %8, %9, %cst_9 {dimension_numbers = #tpu.dot_dimension_numbers<[2], [2], [1], [1], [0, 0, 0, 1, 1, 1], [0], [0]>} : vector<1x8x32xbf16>, vector<1x8x32xbf16>, vector<1x8x8xf32> -> vector<1x8x8xf32>
    "tpu.trace_stop"() : () -> ()
    %c0_10 = arith.constant 0 : index
    %c0_11 = arith.constant 0 : index
    %c0_12 = arith.constant 0 : index
    %12 = vector.load %arg8[%c0_10, %c0_11, %c0_12] : memref<1x8x1xf32, #tpu.memory_space<vmem>>, vector<1x8x1xf32>
    %cst_13 = arith.constant dense<0xFF800000> : vector<1x8xf32>
    %13 = vector.multi_reduction <maximumf>, %11, %cst_13 [2] : vector<1x8x8xf32> to vector<1x8xf32>
    %14 = vector.shape_cast %13 : vector<1x8xf32> to vector<1x8x1xf32>
    %15 = arith.maximumf %12, %14 : vector<1x8x1xf32>
    %16 = arith.subf %12, %15 : vector<1x8x1xf32>
    %17 = math.exp %16 : vector<1x8x1xf32>
    %18 = vector.broadcast %15 : vector<1x8x1xf32> to vector<1x8x8xf32>
    %19 = arith.subf %11, %18 : vector<1x8x8xf32>
    %20 = math.exp %19 : vector<1x8x8xf32>
    %c0_14 = arith.constant 0 : index
    %c0_15 = arith.constant 0 : index
    %c0_16 = arith.constant 0 : index
    %21 = vector.load %arg9[%c0_14, %c0_15, %c0_16] : memref<1x8x1xf32, #tpu.memory_space<vmem>>, vector<1x8x1xf32>
    %22 = arith.mulf %17, %21 : vector<1x8x1xf32>
    %cst_17 = arith.constant dense<0.000000e+00> : vector<1x8xf32>
    %23 = vector.multi_reduction <add>, %20, %cst_17 [2] : vector<1x8x8xf32> to vector<1x8xf32>
    %24 = vector.shape_cast %23 : vector<1x8xf32> to vector<1x8x1xf32>
    %25 = arith.addf %22, %24 : vector<1x8x1xf32>
    %c0_18 = arith.constant 0 : index
    %c0_19 = arith.constant 0 : index
    %c0_20 = arith.constant 0 : index
    %26 = vector.load %arg9[%c0_18, %c0_19, %c0_20] : memref<1x8x1xf32, #tpu.memory_space<vmem>>, vector<1x8x1xf32>
    tpu.vector_store %arg9[%c0_18, %c0_19, %c0_20], %25 {strides = array<i32>} : memref<1x8x1xf32, #tpu.memory_space<vmem>>, vector<1x8x1xf32>,
    %c0_21 = arith.constant 0 : index
    %c0_22 = arith.constant 0 : index
    %c0_23 = arith.constant 0 : index
    %27 = vector.load %arg8[%c0_21, %c0_22, %c0_23] : memref<1x8x1xf32, #tpu.memory_space<vmem>>, vector<1x8x1xf32>
    tpu.vector_store %arg8[%c0_21, %c0_22, %c0_23], %15 {strides = array<i32>} : memref<1x8x1xf32, #tpu.memory_space<vmem>>, vector<1x8x1xf32>,
    %c0_24 = arith.constant 0 : index
    %c0_25 = arith.constant 0 : index
    %c0_26 = arith.constant 0 : index
    %28 = vector.load %arg10[%c0_24, %c0_25, %c0_26] : memref<1x8x128xf32, #tpu.memory_space<vmem>>, vector<1x8x128xf32>
    %29 = vector.broadcast %17 : vector<1x8x1xf32> to vector<1x8x128xf32>
    %30 = arith.mulf %29, %28 : vector<1x8x128xf32>
    %31 = arith.truncf %20 : vector<1x8x8xf32> to vector<1x8x8xbf16>
    "tpu.trace_start"() <{level = 10 : i32, message = "bqk,bkd->bqd"}> : () -> ()
    %cst_27 = arith.constant dense<0.000000e+00> : vector<1x8x128xf32>
    %32 = tpu.matmul %31, %10, %cst_27 {dimension_numbers = #tpu.dot_dimension_numbers<[2], [1], [1], [2], [0, 0, 0, 1, 1, 2], [0], [0]>} : vector<1x8x8xbf16>, vector<1x8x128xbf16>, vector<1x8x128xf32> -> vector<1x8x128xf32>
    "tpu.trace_stop"() : () -> ()
    %33 = arith.addf %30, %32 : vector<1x8x128xf32>
    %c0_28 = arith.constant 0 : index
    %c0_29 = arith.constant 0 : index
    %c0_30 = arith.constant 0 : index
    %34 = vector.load %arg10[%c0_28, %c0_29, %c0_30] : memref<1x8x128xf32, #tpu.memory_space<vmem>>, vector<1x8x128xf32>
    tpu.vector_store %arg10[%c0_28, %c0_29, %c0_30], %33 {strides = array<i32>} : memref<1x8x128xf32, #tpu.memory_space<vmem>>, vector<1x8x128xf32>,
    %c3_i32 = arith.constant 3 : i32
    %35 = arith.cmpi eq, %arg2, %c3_i32 : i32
    %36 = arith.extui %35 : i1 to i32
    %c0_i32_31 = arith.constant 0 : i32
    %37 = arith.cmpi ne, %36, %c0_i32_31 : i32
    scf.if %37 {
      %c0_32 = arith.constant 0 : index
      %c0_33 = arith.constant 0 : index
      %c0_34 = arith.constant 0 : index
      %38 = vector.load %arg9[%c0_32, %c0_33, %c0_34] : memref<1x8x1xf32, #tpu.memory_space<vmem>>, vector<1x8x1xf32>
      %39 = tpu.reciprocal %38 {approx = true} : vector<1x8x1xf32> -> vector<1x8x1xf32>
      %c0_35 = arith.constant 0 : index
      %c0_36 = arith.constant 0 : index
      %c0_37 = arith.constant 0 : index
      %40 = vector.load %arg10[%c0_35, %c0_36, %c0_37] : memref<1x8x128xf32, #tpu.memory_space<vmem>>, vector<1x8x128xf32>
      %41 = vector.broadcast %39 : vector<1x8x1xf32> to vector<1x8x128xf32>
      %42 = arith.mulf %40, %41 : vector<1x8x128xf32>
      %c0_38 = arith.constant 0 : index
      %c0_39 = arith.constant 0 : index
      %c0_40 = arith.constant 0 : index
      %43 = vector.load %arg7[%c0_38, %c0_39, %c0_40] : memref<1x8x128xf32, #tpu.memory_space<vmem>>, vector<1x8x128xf32>
      tpu.vector_store %arg7[%c0_38, %c0_39, %c0_40], %42 {strides = array<i32>} : memref<1x8x128xf32, #tpu.memory_space<vmem>>, vector<1x8x128xf32>,
    } else {
    }
    return
  }
  func.func @transform_0(%arg0: i32, %arg1: i32, %arg2: i32, %arg3: memref<1xi32, #tpu.memory_space<smem>>) -> (i32, i32, i32) {
    %c0_i32 = arith.constant 0 : i32
    %c0_i32_0 = arith.constant 0 : i32
    return %arg0, %arg1, %c0_i32 : i32, i32, i32
  }
  func.func @transform_1(%arg0: i32, %arg1: i32, %arg2: i32, %arg3: memref<1xi32, #tpu.memory_space<smem>>) -> (i32, i32, i32) {
    %c0_i32 = arith.constant 0 : i32
    %c0_i32_0 = arith.constant 0 : i32
    return %arg0, %arg2, %c0_i32 : i32, i32, i32
  }
  func.func @transform_2(%arg0: i32, %arg1: i32, %arg2: i32, %arg3: memref<1xi32, #tpu.memory_space<smem>>) -> (i32, i32, i32) {
    %c0_i32 = arith.constant 0 : i32
    %c0_i32_0 = arith.constant 0 : i32
    return %arg0, %arg2, %c0_i32 : i32, i32, i32
  }
  func.func @transform_3(%arg0: i32, %arg1: i32, %arg2: i32, %arg3: memref<1xi32, #tpu.memory_space<smem>>) -> (i32, i32, i32) {
    %c0_i32 = arith.constant 0 : i32
    %c0_i32_0 = arith.constant 0 : i32
    return %arg0, %arg1, %c0_i32 : i32, i32, i32
  }
}

</mosaic_0001>

<llo_original>
// kernel: tpu_custom_call.1
$region0: #{tpu_custom_call.1}
  #allocation0 [shape = 'u32[]', space=smem, size = 0x4, offset = 0x4, fixed_abs, tag = 'smem constant byte address 0x4 - core index']
  #allocation1 [shape = 'u32[72,128]{1,0:T(1,128)}', space=vmem, size = 0x9000, scoped, tag = 'internal scratch']
  #allocation2 [shape = 'f32[1,8,1]{2,1,0:T(8,128)}', space=vmem, size = 0x1000, scoped, tag = 'scratch operand']
  #allocation3 [shape = 'f32[1,8,1]{2,1,0:T(8,128)}', space=vmem, size = 0x1000, scoped, tag = 'scratch operand']
  #allocation4 [shape = 'f32[1,8,128]{2,1,0:T(8,128)}', space=vmem, size = 0x1000, scoped, tag = 'scratch operand']
  #allocation5 [shape = 's32[1]{0}', space=sflag, size = 0x4, scoped, tag = 'scoped memory for tpu_custom_call.1']
  #allocation6 [shape = 's32[1]{0:T(128)S(6)}', space=smem, size = 0x200, scoped, tag = 'prefetched SMEM operand 0']
  %s0 = inlined_call_operand.<no memory space> [shape: s32[1], index: 0, kind: input, shape index: {}]
  %s1 = inlined_call_operand.hbm [shape: f32[2,16,32], index: 1, kind: input, shape index: {}]
  %s2 = inlined_call_operand.hbm [shape: f32[2,32,32], index: 2, kind: input, shape index: {}]
  %s3 = inlined_call_operand.hbm [shape: f32[2,32,128], index: 3, kind: input, shape index: {}]
  %s4 = inlined_call_operand.hbm [shape: f32[2,16,128], index: 4, kind: output, shape index: {}]
  %s5 = sld [smem:[#allocation0]]
  $region65: #{tpu_custom_call.1} parent=0
    _
  %s7 = ssub.s32 1, %s5
  %s8 = scalar_select 0, %s7, %s5
  %9 = sst [smem:[#allocation6]] %s0
  $region1: #{tpu_custom_call.1} parent=0
    #allocation7 [shape = 'u8[8192]{0}', space=vmem, size = 0x2000, scoped, tag = 'input window, operand 1']
    #allocation8 [shape = 's32[2]{0}', space=sflag, size = 0x8, scoped, tag = 'scoped memory for tpu_custom_call.1']
    #allocation9 [shape = 's32[2]{0}', space=sflag, size = 0x8, scoped, tag = 'scoped memory for tpu_custom_call.1']
    #allocation10 [shape = 'u8[8192]{0}', space=vmem, size = 0x2000, scoped, tag = 'input window, operand 2']
    #allocation11 [shape = 's32[2]{0}', space=sflag, size = 0x8, scoped, tag = 'scoped memory for tpu_custom_call.1']
    #allocation12 [shape = 'u8[8192]{0}', space=vmem, size = 0x2000, scoped, tag = 'input window, operand 3']
    #allocation13 [shape = 'u8[8192]{0}', space=vmem, size = 0x2000, scoped, tag = 'output window, operand 0']
    %10 = vsyncpa [#allocation8], 0
    %s11 = scalar_lea.sflag [#allocation8], 1
    %12 = vsyncpa %s11, 0
    %13 = vsyncpa [#allocation11], 0
    %s14 = scalar_lea.sflag [#allocation11], 1
    %15 = vsyncpa %s14, 0
    %16 = vsyncpa [#allocation9], 0
    %s17 = scalar_lea.sflag [#allocation9], 1
    %18 = vsyncpa %s17, 0
    loop: start=0, step=1, limit=18
    $region2: #{tpu_custom_call.1} parent=1 // loop_pre_header
      _
    $region3: #{tpu_custom_call.1} parent=1 // loop_header
      %s20 = sphi 0, %s24
      %p21 = scmp.ge.s32.totalorder %s20, 18
      %s27 = sphi 0, %s46
      %s28 = sphi 0, %s42
      %s29 = sphi 0, %s38
      %s30 = sphi 0, %s27
      %s31 = sphi 0, %s28
      %s32 = sphi 0, %s29
      %s33 = sphi 0, %s30
      %s34 = sphi 0, %s31
      %s35 = sphi 0, %s32
      %s51 = sphi 0, %s53
      %s54 = sphi 0, %s51
      %s55 = sphi 0, %s54
      %s71 = sphi 0, %s55
      %s79 = sphi 0, %s81
      %s82 = sphi 0, %s79
      %s83 = sphi 0, %s82
      %s99 = sphi 0, %s83
      %s107 = sphi 0, %s109
      %s110 = sphi 0, %s107
      %s111 = sphi 0, %s110
      %s127 = sphi 0, %s111
      %s135 = sphi 0, %s137
      %s138 = sphi 0, %s135
      %s139 = sphi 0, %s138
      %s155 = sphi 0, %s139
    $region4: #{tpu_custom_call.1} parent=1 // loop_header_branch
      %23 = sbr.rel (%p21) target = $region8
    $region5: #{tpu_custom_call.1} parent=1 // loop_body
      %s25 = ssub.s32 %s20, 1
      %s26 = ssub.s32 %s20, 2
      %s36 = sadd.s32 1, %s29
      %p37 = scmp.ge.s32.totalorder %s36, 4
      %s38 = scalar_select %p37, 0, %s36
      %s39 = sadd.s32 1, %s28
      %s40 = scalar_select %p37, %s39, %s28
      %p41 = scmp.ge.s32.totalorder %s40, 2
      %s42 = scalar_select %p41, 0, %s40
      %s43 = sadd.s32 1, %s27
      %s44 = scalar_select %p41, %s43, %s27
      %p45 = scmp.ge.s32.totalorder %s44, 2
      %s46 = scalar_select %p45, 0, %s44
      %s47 = ssub.s32 %s27, %s46
      %s48 = ssub.s32 %s28, %s42
      %s49 = sor.u32 %s47, %s48
      %p50 = scmp.eq.s32.totalorder %s49, 0
      %s52 = sadd.s32 %s51, 1
      %s53 = scalar_select %p50, %s51, %s52
      %p56 = pneg %p50
      %p57 = scmp.eq.s32.totalorder %s20, 15
      %p58 = por %p56, %p57
      %p59 = scmp.ne.s32.totalorder %s51, %s54
      %p60 = scmp.eq.s32.totalorder %s20, 0
      %p61 = por %p59, %p60
      %p62 = scmp.ne.s32.totalorder %s51, %s54
      %p63 = scmp.eq.s32.totalorder %s25, 15
      %p64 = por %p62, %p63
      %p65 = scmp.ne.s32.totalorder %s54, %s55
      %p66 = scmp.eq.s32.totalorder %s25, 0
      %p67 = por %p65, %p66
      %p68 = scmp.ne.s32.totalorder %s54, %s55
      %p69 = scmp.eq.s32.totalorder %s26, 15
      %p70 = por %p68, %p69
      %p72 = scmp.ne.s32.totalorder %s55, %s71
      %p73 = scmp.eq.s32.totalorder %s26, 0
      %p74 = por %p72, %p73
      %s75 = ssub.s32 %s27, %s46
      %s76 = ssub.s32 %s29, %s38
      %s77 = sor.u32 %s75, %s76
      %p78 = scmp.eq.s32.totalorder %s77, 0
      %s80 = sadd.s32 %s79, 1
      %s81 = scalar_select %p78, %s79, %s80
      %p84 = pneg %p78
      %p85 = scmp.eq.s32.totalorder %s20, 15
      %p86 = por %p84, %p85
      %p87 = scmp.ne.s32.totalorder %s79, %s82
      %p88 = scmp.eq.s32.totalorder %s20, 0
      %p89 = por %p87, %p88
      %p90 = scmp.ne.s32.totalorder %s79, %s82
      %p91 = scmp.eq.s32.totalorder %s25, 15
      %p92 = por %p90, %p91
      %p93 = scmp.ne.s32.totalorder %s82, %s83
      %p94 = scmp.eq.s32.totalorder %s25, 0
      %p95 = por %p93, %p94
      %p96 = scmp.ne.s32.totalorder %s82, %s83
      %p97 = scmp.eq.s32.totalorder %s26, 15
      %p98 = por %p96, %p97
      %p100 = scmp.ne.s32.totalorder %s83, %s99
      %p101 = scmp.eq.s32.totalorder %s26, 0
      %p102 = por %p100, %p101
      %s103 = ssub.s32 %s27, %s46
      %s104 = ssub.s32 %s29, %s38
      %s105 = sor.u32 %s103, %s104
      %p106 = scmp.eq.s32.totalorder %s105, 0
      %s108 = sadd.s32 %s107, 1
      %s109 = scalar_select %p106, %s107, %s108
      %p112 = pneg %p106
      %p113 = scmp.eq.s32.totalorder %s20, 15
      %p114 = por %p112, %p113
      %p115 = scmp.ne.s32.totalorder %s107, %s110
      %p116 = scmp.eq.s32.totalorder %s20, 0
      %p117 = por %p115, %p116
      %p118 = scmp.ne.s32.totalorder %s107, %s110
      %p119 = scmp.eq.s32.totalorder %s25, 15
      %p120 = por %p118, %p119
      %p121 = scmp.ne.s32.totalorder %s110, %s111
      %p122 = scmp.eq.s32.totalorder %s25, 0
      %p123 = por %p121, %p122
      %p124 = scmp.ne.s32.totalorder %s110, %s111
      %p125 = scmp.eq.s32.totalorder %s26, 15
      %p126 = por %p124, %p125
      %p128 = scmp.ne.s32.totalorder %s111, %s127
      %p129 = scmp.eq.s32.totalorder %s26, 0
      %p130 = por %p128, %p129
      %s131 = ssub.s32 %s27, %s46
      %s132 = ssub.s32 %s28, %s42
      %s133 = sor.u32 %s131, %s132
      %p134 = scmp.eq.s32.totalorder %s133, 0
      %s136 = sadd.s32 %s135, 1
      %s137 = scalar_select %p134, %s135, %s136
      %p140 = pneg %p134
      %p141 = scmp.eq.s32.totalorder %s20, 15
      %p142 = por %p140, %p141
      %p143 = scmp.ne.s32.totalorder %s135, %s138
      %p144 = scmp.eq.s32.totalorder %s20, 0
      %p145 = por %p143, %p144
      %p146 = scmp.ne.s32.totalorder %s135, %s138
      %p147 = scmp.eq.s32.totalorder %s25, 15
      %p148 = por %p146, %p147
      %p149 = scmp.ne.s32.totalorder %s138, %s139
      %p150 = scmp.eq.s32.totalorder %s25, 0
      %p151 = por %p149, %p150
      %p152 = scmp.ne.s32.totalorder %s138, %s139
      %p153 = scmp.eq.s32.totalorder %s26, 15
      %p154 = por %p152, %p153
      %p156 = scmp.ne.s32.totalorder %s139, %s155
      %p157 = scmp.eq.s32.totalorder %s26, 0
      %p158 = por %p156, %p157
      %p159 = scmp.le.s32.totalorder 1, %s20
      %p160 = scmp.lt.s32.totalorder %s20, 17
      %p161 = pnand %p159, %p160
      %p162 = pneg %p161
      // Predicated region
      $region9: #{tpu_custom_call.1} parent=5 // pred_check
        _
      $region10: #{tpu_custom_call.1} parent=5 // pred_check_branch
        %164 = sbr.rel (%p161) target = $region12
      $region11: #{tpu_custom_call.1} parent=5 // pred_region
        %s165 = ssub.s32 %s20, 1
      $region12: #{tpu_custom_call.1} parent=5 // pred_fallthru
        _
      %p166 = scmp.lt.s32.totalorder %s20, 16
      // Predicated region
      $region13: #{tpu_custom_call.1} parent=5 // pred_check
        %p167 = pneg %p166
      $region14: #{tpu_custom_call.1} parent=5 // pred_check_branch
        %169 = sbr.rel (%p167) target = $region16
      $region15: #{tpu_custom_call.1} parent=5 // pred_region
        // Predicated region
        $region17: #{tpu_custom_call.1} parent=15 // pred_check
          %p170 = pneg %p61
        $region18: #{tpu_custom_call.1} parent=15 // pred_check_branch
          %172 = sbr.rel (%p170) target = $region20
        $region19: #{tpu_custom_call.1} parent=15 // pred_region
          %s173 = sand.u32 %s51, 1
          %s174 = scalar_lea.sflag [#allocation8], %s173
          %s175 = sand.u32 %s51, 1
          %s176 = smul.addr %s175, 8
          %s177 = scalar_lea.vmem [#allocation7], %s176
          %179 = vsyncadd %s174, 0
          %s180 = smul.addr %s27, 2
          %s181 = sadd.s32 %s28, %s180
          %s182 = smul.addr %s181, 8
          %s183 = scalar_lea.hbm %s1, %s182
          %s185 = sshll.u32 %s183, 4
          %s186 = int_to_ptr.hbm [resolvable:$true] %s185
          %s187 = sshll.u32 %s177, 4
          %s188 = int_to_ptr.vmem [resolvable:$true] %s187
          %190 = dma.hbm_to_vmem [thread:$0]  %s186, 128, %s188, %s174
        $region20: #{tpu_custom_call.1} parent=15 // pred_fallthru
          _
        // Predicated region
        $region21: #{tpu_custom_call.1} parent=15 // pred_check
          %p191 = pneg %p89
        $region22: #{tpu_custom_call.1} parent=15 // pred_check_branch
          %193 = sbr.rel (%p191) target = $region24
        $region23: #{tpu_custom_call.1} parent=15 // pred_region
          %s194 = sand.u32 %s20, 1
          %s195 = scalar_lea.sflag [#allocation11], %s194
          %s196 = sand.u32 %s79, 1
          %s197 = smul.addr %s196, 8
          %s198 = scalar_lea.vmem [#allocation10], %s197
          %200 = vsyncadd %s195, 0
          %s201 = smul.addr %s27, 4
          %s202 = sadd.s32 %s29, %s201
          %s203 = smul.addr %s202, 8
          %s204 = scalar_lea.hbm %s2, %s203
          %s206 = sshll.u32 %s204, 4
          %s207 = int_to_ptr.hbm [resolvable:$true] %s206
          %s208 = sshll.u32 %s198, 4
          %s209 = int_to_ptr.vmem [resolvable:$true] %s208
          %211 = dma.hbm_to_vmem [thread:$0]  %s207, 128, %s209, %s195
        $region24: #{tpu_custom_call.1} parent=15 // pred_fallthru
          _
        // Predicated region
        $region25: #{tpu_custom_call.1} parent=15 // pred_check
          %p212 = pneg %p117
        $region26: #{tpu_custom_call.1} parent=15 // pred_check_branch
          %214 = sbr.rel (%p212) target = $region28
        $region27: #{tpu_custom_call.1} parent=15 // pred_region
          %s215 = sand.u32 %s20, 1
          %s216 = scalar_lea.sflag [#allocation11], %s215
          %s217 = sand.u32 %s107, 1
          %s218 = smul.addr %s217, 8
          %s219 = scalar_lea.vmem [#allocation12], %s218
          %221 = vsyncadd %s216, 0
          %s222 = smul.addr %s27, 4
          %s223 = sadd.s32 %s29, %s222
          %s224 = smul.addr %s223, 8
          %s225 = scalar_lea.hbm %s3, %s224
          %s227 = sshll.u32 %s225, 4
          %s228 = int_to_ptr.hbm [resolvable:$true] %s227
          %s229 = sshll.u32 %s219, 4
          %s230 = int_to_ptr.vmem [resolvable:$true] %s229
          %232 = dma.hbm_to_vmem [thread:$0]  %s228, 128, %s230, %s216
        $region28: #{tpu_custom_call.1} parent=15 // pred_fallthru
          _
      $region16: #{tpu_custom_call.1} parent=5 // pred_fallthru
        _
      %p233 = scmp.le.s32.totalorder 1, %s20
      %p234 = scmp.lt.s32.totalorder %s20, 17
      %p235 = pnand %p233, %p234
      %p236 = pneg %p235
      // Predicated region
      $region29: #{tpu_custom_call.1} parent=5 // pred_check
        _
      $region30: #{tpu_custom_call.1} parent=5 // pred_check_branch
        %238 = sbr.rel (%p235) target = $region32
      $region31: #{tpu_custom_call.1} parent=5 // pred_region
        %s239 = ssub.s32 %s20, 1
        %s240 = sand.u32 %s54, 1
        %s241 = scalar_lea.sflag [#allocation8], %s240
        %s242 = sand.u32 %s54, 1
        %s243 = smul.addr %s242, 8
        %s244 = scalar_lea.vmem [#allocation7], %s243
        // Predicated region
        $region33: #{tpu_custom_call.1} parent=31 // pred_check
          %p245 = pneg %p67
        $region34: #{tpu_custom_call.1} parent=31 // pred_check_branch
          %247 = sbr.rel (%p245) target = $region36
        $region35: #{tpu_custom_call.1} parent=31 // pred_region
          %249 = dma.done %s241, 128
        $region36: #{tpu_custom_call.1} parent=31 // pred_fallthru
          _
        %s250 = sand.u32 %s25, 1
        %s251 = scalar_lea.sflag [#allocation11], %s250
        %s252 = sand.u32 %s82, 1
        %s253 = smul.addr %s252, 8
        %s254 = scalar_lea.vmem [#allocation10], %s253
        // Predicated region
        $region37: #{tpu_custom_call.1} parent=31 // pred_check
          %p255 = pneg %p95
        $region38: #{tpu_custom_call.1} parent=31 // pred_check_branch
          %257 = sbr.rel (%p255) target = $region40
        $region39: #{tpu_custom_call.1} parent=31 // pred_region
          %259 = dma.done %s251, 128
        $region40: #{tpu_custom_call.1} parent=31 // pred_fallthru
          _
        %s260 = sand.u32 %s25, 1
        %s261 = scalar_lea.sflag [#allocation11], %s260
        %s262 = sand.u32 %s110, 1
        %s263 = smul.addr %s262, 8
        %s264 = scalar_lea.vmem [#allocation12], %s263
        // Predicated region
        $region41: #{tpu_custom_call.1} parent=31 // pred_check
          %p265 = pneg %p123
        $region42: #{tpu_custom_call.1} parent=31 // pred_check_branch
          %267 = sbr.rel (%p265) target = $region44
        $region43: #{tpu_custom_call.1} parent=31 // pred_region
          %269 = dma.done %s261, 128
        $region44: #{tpu_custom_call.1} parent=31 // pred_fallthru
          _
        %s270 = sand.u32 %s54, 1
        %s271 = scalar_lea.sflag [#allocation8], %s270
        %s272 = sand.u32 %s54, 1
        %s273 = smul.addr %s272, 8
        %s274 = scalar_lea.vmem [#allocation7], %s273
        %p275 = pneg %p67
        %p276 = pneg %p64
        %s277 = sand.u32 %s25, 1
        %s278 = scalar_lea.sflag [#allocation11], %s277
        %s279 = sand.u32 %s82, 1
        %s280 = smul.addr %s279, 8
        %s281 = scalar_lea.vmem [#allocation10], %s280
        %p282 = pneg %p95
        %p283 = pneg %p92
        %s284 = sand.u32 %s25, 1
        %s285 = scalar_lea.sflag [#allocation11], %s284
        %s286 = sand.u32 %s110, 1
        %s287 = smul.addr %s286, 8
        %s288 = scalar_lea.vmem [#allocation12], %s287
        %p289 = pneg %p123
        %p290 = pneg %p120
        %p291 = pneg %p151
        %p292 = pneg %p148
        %s293 = sand.u32 %s138, 1
        %s294 = scalar_lea.sflag [#allocation9], %s293
        %s295 = sand.u32 %s138, 1
        %s296 = smul.addr %s295, 8
        %s297 = scalar_lea.vmem [#allocation13], %s296
        %p299 = scmp.eq.s32.totalorder %s32, 0
        // Predicated region
        $region45: #{tpu_custom_call.1} parent=31 // pred_check
          %p300 = pneg %p299
        $region46: #{tpu_custom_call.1} parent=31 // pred_check_branch
          %302 = sbr.rel (%p300) target = $region48
        $region47: #{tpu_custom_call.1} parent=31 // pred_region
          %vm303 = vcmask 7168
          %304 = vst.msk [vmem:[#allocation2] sm:$0xff] %vm303, -inf
          %305 = vst.msk [vmem:[#allocation3] sm:$0xff] %vm303, 0.0
          %306 = vst [vmem:[#allocation4] sm:$0xff] 0.0
        $region48: #{tpu_custom_call.1} parent=31 // pred_fallthru
          _
        %v307 = vld [vmem:[%s244] sm:$0xff]
        %v308 = vmul.f32 %v307, 0.5
        %v309 = vld [vmem:[%s254] sm:$0xff]
        %v310 = vld [vmem:[%s264] sm:$0xff]
        %v311 = vpack.c.bf16 %v308, %v308
        %v312 = vpack.c.bf16 %v309, %v309
        %v313 = vpack.c.bf16 %v310, %v310
        %vm314 = vcmask 261120
        %v316 = vsel %vm314, %v311, 0
        %v319 = vsel %vm314, %v312, 0
        %321 = vmatpush.bf16.xpose.msra.mxu0 0
        %322 = vmatpush.bf16.xpose.msra.mxu0 0
        %323 = vmatpush.bf16.xpose.msra.mxu0 0
        %324 = vmatpush.bf16.xpose.msra.mxu0 0
        %325 = vmatpush.bf16.xpose.msra.mxu0 0
        %326 = vmatpush.bf16.xpose.msra.mxu0 0
        %327 = vmatpush.bf16.xpose.msra.mxu0 0
        %328 = vmatpush.bf16.xpose.msra.mxu0 %v319
        %329 = vmatmul.bf16.gmra.mxu0 %v316
        %v330 = vpop.f32.mrf.mxu0
        %v331 = vadd.f32 0.0, %v330
        %v332 = vpop.f32.mrf.mxu0
        %333 = vdwg.mxu0
        %v334 = vld [vmem:[#allocation2] sm:$0xff]
        %vm335 = vcmask 64512
        %v336 = vsel %vm335, %v331, -inf
        %337 = vmax.xlane.f32.xlu0 %v336
        %v338 = vpop.xlane.xlu0 %337
        %v339 = vmax.f32 %v334, %v338
        %v340 = vsub.f32 %v334, %v339
        %v341 = vmul.f32 %v340, 1.442695
        %v342 = vpow.pop %v341
        %344 = vset.pattern.permute.xlu0 0
        %345 = vperm.xlu0 %344, %v339
        %v346 = vpop.permute.xlu0 %345
        %v348 = vsub.f32 %v331, %v346
        %v349 = vmul.f32 %v348, 1.442695
        %v350 = vpow.pop %v349
        %v351 = vld [vmem:[#allocation3] sm:$0xff]
        %v352 = vmul.f32 %v342, %v351
        %v353 = vsel %vm335, %v350, 0.0
        %354 = vadd.xlane.f32.xlu0 %v353
        %v355 = vpop.xlane.xlu0 %354
        %v356 = vadd.f32 %v352, %v355
        %vm357 = vcmask 7168
        %358 = vst.msk [vmem:[#allocation3] sm:$0xff] %vm357, %v356
        %359 = vst.msk [vmem:[#allocation2] sm:$0xff] %vm357, %v339
        %v360 = vld [vmem:[#allocation4] sm:$0xff]
        %362 = vset.pattern.permute.xlu0 0
        %363 = vperm.xlu0 %362, %v342
        %v364 = vpop.permute.xlu0 %363
        %v366 = vmul.f32 %v364, %v360
        %v367 = vpack.c.bf16 %v350, %v350
        %v369 = vsel %vm335, %v367, 0
        %vm371 = vcmask 1043456
        %v373 = vsel %vm371, %v313, 0
        %375 = vmatpush.bf16.msra.mxu0 0
        %376 = vmatpush.bf16.msra.mxu0 0
        %377 = vmatpush.bf16.msra.mxu0 0
        %378 = vmatpush.bf16.msra.mxu0 0
        %379 = vmatpush.bf16.msra.mxu0 0
        %380 = vmatpush.bf16.msra.mxu0 0
        %381 = vmatpush.bf16.msra.mxu0 0
        %382 = vmatpush.bf16.msra.mxu0 %v373
        %383 = vmatmul.bf16.gmra.mxu0 %v369
        %v384 = vpop.f32.mrf.mxu0
        %v385 = vadd.f32 0.0, %v384
        %v386 = vpop.f32.mrf.mxu0
        %387 = vdwg.mxu0
        %v388 = vadd.f32 %v366, %v385
        %389 = vst [vmem:[#allocation4] sm:$0xff] %v388
        %p390 = scmp.eq.s32.totalorder %s32, 3
        // Predicated region
        $region49: #{tpu_custom_call.1} parent=31 // pred_check
          %p391 = pneg %p390
        $region50: #{tpu_custom_call.1} parent=31 // pred_check_branch
          %393 = sbr.rel (%p391) target = $region52
        $region51: #{tpu_custom_call.1} parent=31 // pred_region
          %v394 = vld [vmem:[#allocation3] sm:$0xff]
          %v395 = vrcp.pop %v394
          %v396 = vld [vmem:[#allocation4] sm:$0xff]
          %398 = vset.pattern.permute.xlu0 0
          %399 = vperm.xlu0 %398, %v395
          %v400 = vpop.permute.xlu0 %399
          %v402 = vmul.f32 %v396, %v400
          %403 = vst [vmem:[%s297] sm:$0xff] %v402
        $region52: #{tpu_custom_call.1} parent=31 // pred_fallthru
          _
        %s404 = sand.u32 %s138, 1
        %s405 = scalar_lea.sflag [#allocation9], %s404
        %s406 = sand.u32 %s138, 1
        %s407 = smul.addr %s406, 8
        %s408 = scalar_lea.vmem [#allocation13], %s407
        // Predicated region
        $region53: #{tpu_custom_call.1} parent=31 // pred_check
          %p409 = pneg %p148
        $region54: #{tpu_custom_call.1} parent=31 // pred_check_branch
          %411 = sbr.rel (%p409) target = $region56
        $region55: #{tpu_custom_call.1} parent=31 // pred_region
          %413 = vsyncadd %s405, 0
          %s414 = smul.addr %s30, 2
          %s415 = sadd.s32 %s31, %s414
          %s416 = smul.addr %s415, 8
          %s417 = scalar_lea.hbm %s4, %s416
          %s419 = sshll.u32 %s408, 4
          %s420 = int_to_ptr.vmem [resolvable:$true] %s419
          %s421 = sshll.u32 %s417, 4
          %s422 = int_to_ptr.hbm [resolvable:$true] %s421
          %424 = dma.vmem_to_hbm [thread:$0]  %s420, 128, %s422, %s405
        $region56: #{tpu_custom_call.1} parent=31 // pred_fallthru
          _
      $region32: #{tpu_custom_call.1} parent=5 // pred_fallthru
        _
      %p425 = scmp.le.s32.totalorder 2, %s20
      // Predicated region
      $region57: #{tpu_custom_call.1} parent=5 // pred_check
        %p426 = pneg %p425
      $region58: #{tpu_custom_call.1} parent=5 // pred_check_branch
        %428 = sbr.rel (%p426) target = $region60
      $region59: #{tpu_custom_call.1} parent=5 // pred_region
        %s429 = ssub.s32 %s20, 2
        // Predicated region
        $region61: #{tpu_custom_call.1} parent=59 // pred_check
          %p430 = pneg %p154
        $region62: #{tpu_custom_call.1} parent=59 // pred_check_branch
          %432 = sbr.rel (%p430) target = $region64
        $region63: #{tpu_custom_call.1} parent=59 // pred_region
          %s433 = sand.u32 %s139, 1
          %s434 = scalar_lea.sflag [#allocation9], %s433
          %s435 = sand.u32 %s139, 1
          %s436 = smul.addr %s435, 8
          %s437 = scalar_lea.vmem [#allocation13], %s436
          %439 = dma.done %s434, 128
        $region64: #{tpu_custom_call.1} parent=59 // pred_fallthru
          _
      $region60: #{tpu_custom_call.1} parent=5 // pred_fallthru
        _
    $region6: #{tpu_custom_call.1} parent=1 // loop_footer
      %s24 = sadd.s32 1, %s20
    $region7: #{tpu_custom_call.1} parent=1 // loop_footer_branch
      %19 = sbr.rel target = $region3
    $region8: #{tpu_custom_call.1} parent=1 // loop_exit
      _
    %440 = vsyncpa [#allocation8], 1
    %s441 = scalar_lea.sflag [#allocation8], 1
    %442 = vsyncpa %s441, 1
    %443 = vsyncpa [#allocation11], 1
    %s444 = scalar_lea.sflag [#allocation11], 1
    %445 = vsyncpa %s444, 1
    %446 = vsyncpa [#allocation9], 1
    %s447 = scalar_lea.sflag [#allocation9], 1
    %448 = vsyncpa %s447, 1

</llo_original>
